<compile_context>
chip_gen: v5e
topology: v5e:2x2
jax: 0.10.0
libtpu: 0.0.40
codegen_flags: <defaults>
</compile_context>

<pallas_src>
import jax
import jax.numpy as jnp
from jax.experimental import pallas as pl
from jax.experimental.pallas import tpu as pltpu


def _mlp_kernel(x_ref, w1_ref, b1_ref, w2_ref, b2_ref, o_ref):
    # fc1 on the MXU: (TB, D) @ (D, H) -> (TB, H) with f32 accumulation.
    h = jnp.dot(x_ref[...], w1_ref[...], preferred_element_type=jnp.float32)
    h = jnp.maximum(h + b1_ref[...], 0.0)

    # fc2: contract H of the (1, H) weight row against H of h (A @ B^T
    # orientation).  Result is (1, TB) -- lane-dense over the batch tile.
    z = jax.lax.dot_general(
        w2_ref[...], h,
        dimension_numbers=(((1,), (1,)), ((), ())),
        preferred_element_type=jnp.float32,
    )
    z = z + b2_ref[...]  # (1, 1) bias broadcasts over the (1, TB) slab

    # Exact, overflow-safe sigmoid: 0.5 * tanh(z/2) + 0.5 (tanh runs on the EUP).
    o_ref[...] = (0.5 * jnp.tanh(0.5 * z) + 0.5).astype(o_ref.dtype)


def _round_up(n, m):
    return ((n + m - 1) // m) * m


def feature_classifier(x, w1, b1, w2, b2, *, x_tile_bytes=2 << 20):
    """sigmoid(relu(x @ w1 + b1) @ w2 + b2); x: [B, D] -> [B, 1] f32."""
    B, D = x.shape
    H = w1.shape[1]

    x_item = jnp.dtype(x.dtype).itemsize
    w_item = jnp.dtype(w1.dtype).itemsize
    row_bytes = D * x_item

    # --- batch tile: byte-budgeted, lane/sublane friendly -------------------
    # Target ~1-2 MiB of x per tile (128 KiB tiles are step-overhead bound and
    # leave ~3x HBM bandwidth on the table).
    tb = _round_up(max(x_tile_bytes // row_bytes, 128), 128)

    # Cap TB against a conservative VMEM budget valid on every generation
    # (v7x: 64 MiB physical per TensorCore).  Budget = double-buffered x tile
    # + double-buffered pinned w1/b1/w2 + (1, TB) f32 output slab + slack.
    VMEM_BUDGET = 40 << 20
    fixed_bytes = 2 * (D * H * w_item) + 4 * (H * w_item) + (1 << 20)
    stream_budget = max(VMEM_BUDGET - fixed_bytes, 2 * 128 * (row_bytes + 4))
    max_tb = max((stream_budget // (2 * (row_bytes + 4))) // 128 * 128, 128)
    tb = min(tb, max_tb)

    # No host-side pad: Pallas handles a ragged last block.  If the whole batch
    # fits one byte-budget tile, either split it in two (so both v7x cores get
    # work) or, for small batches, use a single full-array block.
    if B <= tb:
        tb = _round_up(pl.cdiv(B, 2), 128) if B >= 256 else B
    grid = (pl.cdiv(B, tb),)

    # Explicit scoped-VMEM limit (v5e default 16 MiB, v6e/v7x 32 MiB).
    vmem_needed = 2 * tb * row_bytes + 2 * tb * 4 + fixed_bytes
    vmem_limit = int(min(max(vmem_needed + (2 << 20), 8 << 20), 60 << 20))

    # bf16 fast path: accept bf16 x from the caller (halves the dominant HBM
    # stream); only the small w1 operand is re-cast here, never x itself.
    w1 = w1.astype(x.dtype)
    w2_row = w2.reshape(1, H).astype(jnp.float32)   # (H, 1) -> (1, H) row
    b1_row = b1.reshape(1, H).astype(jnp.float32)
    b2_sc = b2.reshape(1, 1).astype(jnp.float32)

    out_row = pl.pallas_call(
        _mlp_kernel,
        out_shape=jax.ShapeDtypeStruct((1, B), jnp.float32),
        grid=grid,
        in_specs=[
            pl.BlockSpec((tb, D), lambda i: (i, 0)),   # x: streamed row tiles
            pl.BlockSpec((D, H), lambda i: (0, 0)),    # w1: VMEM-resident
            pl.BlockSpec((1, H), lambda i: (0, 0)),    # b1: VMEM-resident
            pl.BlockSpec((1, H), lambda i: (0, 0)),    # w2 row: VMEM-resident
            pl.BlockSpec((1, 1), lambda i: (0, 0)),    # b2 scalar (VMEM block)
        ],
        out_specs=pl.BlockSpec((1, tb), lambda i: (0, i)),  # lane-dense slab
        compiler_params=pltpu.CompilerParams(
            dimension_semantics=("parallel",),
            vmem_limit_bytes=vmem_limit,
        ),
    )(x, w1, b1_row, w2_row, b2_sc)

    # (1, B) lane-dense slab -> [B, 1]; reshape preserves row order.
    return out_row.reshape(B, 1)


def init_params(key, input_size, hidden=64):
    """Deterministic init mimicking nn.Linear's U(-1/sqrt(fan_in), 1/sqrt(fan_in))."""
    k1, k2, k3, k4 = jax.random.split(key, 4)
    bound1 = 1.0 / jnp.sqrt(input_size)
    bound2 = 1.0 / jnp.sqrt(hidden)
    w1 = jax.random.uniform(k1, (input_size, hidden), jnp.float32, -bound1, bound1)
    b1 = jax.random.uniform(k2, (1, hidden), jnp.float32, -bound1, bound1)
    w2 = jax.random.uniform(k3, (hidden, 1), jnp.float32, -bound2, bound2)
    b2 = jax.random.uniform(k4, (1, 1), jnp.float32, -bound2, bound2)
    return w1, b1, w2, b2


if __name__ == "__main__":
    key = jax.random.PRNGKey(0)
    kx, kp, kx2 = jax.random.split(key, 3)

    batch, input_size = 8, 32
    x = jax.random.normal(kx, (batch, input_size), jnp.float32)
    w1, b1, w2, b2 = init_params(kp, input_size)

    out = feature_classifier(x, w1, b1, w2, b2)
    jax.block_until_ready(out)

    ref = jax.nn.sigmoid(jnp.maximum(x @ w1 + b1, 0.0) @ w2 + b2)
    assert out.shape == (batch, 1)
    # Tolerance covers MXU default-precision differences between the in-kernel
    # f32-accumulated matmuls and the XLA reference matmuls.
    assert jnp.allclose(out, ref, atol=2e-3, rtol=2e-3), "mismatch vs reference (small batch)"

    # Multi-tile ragged-grid path: B=300 -> TB=256, grid=(2,), no host-side pad.
    batch2 = 300
    x2 = jax.random.normal(kx2, (batch2, input_size), jnp.float32)
    out2 = feature_classifier(x2, w1, b1, w2, b2)
    jax.block_until_ready(out2)
    ref2 = jax.nn.sigmoid(jnp.maximum(x2 @ w1 + b1, 0.0) @ w2 + b2)
    assert out2.shape == (batch2, 1)
    assert jnp.allclose(out2, ref2, atol=2e-3, rtol=2e-3), "mismatch vs reference (gridded)"

    print("KERNEL_OK")
</pallas_src>

<mosaic_0001>
module attributes {stable_mosaic.version = 11 : i64} {
  func.func @_mlp_kernel(%arg0: i32, %arg1: memref<8x32xf32, #tpu.memory_space<vmem>>, %arg2: memref<32x64xf32, #tpu.memory_space<vmem>>, %arg3: memref<1x64xf32, #tpu.memory_space<vmem>>, %arg4: memref<1x64xf32, #tpu.memory_space<vmem>>, %arg5: memref<1x1xf32, #tpu.memory_space<vmem>>, %arg6: memref<1x8xf32, #tpu.memory_space<vmem>>) attributes {dimension_semantics = [#tpu.dimension_semantics<parallel>], iteration_bounds = array<i64: 1>, scalar_prefetch = 0 : i64, scratch_operands = 0 : i64, tpu.core_type = #tpu.core_type<tc>, window_params = [{transform_indices = @transform_0, window_bounds = array<i64: 8, 32>}, {pipeline_mode = #tpu.pipeline_mode<synchronous>, transform_indices = @transform_1, window_bounds = array<i64: 32, 64>}, {pipeline_mode = #tpu.pipeline_mode<synchronous>, transform_indices = @transform_2, window_bounds = array<i64: 1, 64>}, {pipeline_mode = #tpu.pipeline_mode<synchronous>, transform_indices = @transform_3, window_bounds = array<i64: 1, 64>}, {pipeline_mode = #tpu.pipeline_mode<synchronous>, transform_indices = @transform_4, window_bounds = array<i64: 1, 1>}, {transform_indices = @transform_5, window_bounds = array<i64: 1, 8>}]} {
    %c0 = arith.constant 0 : index
    %c0_0 = arith.constant 0 : index
    %0 = vector.load %arg1[%c0, %c0_0] : memref<8x32xf32, #tpu.memory_space<vmem>>, vector<8x32xf32>
    %c0_1 = arith.constant 0 : index
    %c0_2 = arith.constant 0 : index
    %1 = vector.load %arg2[%c0_1, %c0_2] : memref<32x64xf32, #tpu.memory_space<vmem>>, vector<32x64xf32>
    %cst = arith.constant dense<0.000000e+00> : vector<8x64xf32>
    %2 = tpu.matmul %0, %1, %cst {dimension_numbers = #tpu.dot_dimension_numbers<[1], [0], [0], [1], [0, 0, 1, 1], [], []>} : vector<8x32xf32>, vector<32x64xf32>, vector<8x64xf32> -> vector<8x64xf32>
    %c0_3 = arith.constant 0 : index
    %c0_4 = arith.constant 0 : index
    %3 = vector.load %arg3[%c0_3, %c0_4] : memref<1x64xf32, #tpu.memory_space<vmem>>, vector<1x64xf32>
    %4 = vector.broadcast %3 : vector<1x64xf32> to vector<8x64xf32>
    %5 = arith.addf %2, %4 : vector<8x64xf32>
    %cst_5 = arith.constant 0.000000e+00 : f32
    %6 = vector.broadcast %cst_5 : f32 to vector<8x64xf32>
    %7 = arith.maximumf %5, %6 : vector<8x64xf32>
    %c0_6 = arith.constant 0 : index
    %c0_7 = arith.constant 0 : index
    %8 = vector.load %arg4[%c0_6, %c0_7] : memref<1x64xf32, #tpu.memory_space<vmem>>, vector<1x64xf32>
    %cst_8 = arith.constant dense<0.000000e+00> : vector<1x8xf32>
    %9 = tpu.matmul %8, %7, %cst_8 {dimension_numbers = #tpu.dot_dimension_numbers<[1], [1], [0], [0], [0, 0, 1, 0], [], []>} : vector<1x64xf32>, vector<8x64xf32>, vector<1x8xf32> -> vector<1x8xf32>
    %c0_9 = arith.constant 0 : index
    %c0_10 = arith.constant 0 : index
    %10 = vector.load %arg5[%c0_9, %c0_10] : memref<1x1xf32, #tpu.memory_space<vmem>>, vector<1x1xf32>
    %11 = vector.broadcast %10 : vector<1x1xf32> to vector<1x8xf32>
    %12 = arith.addf %9, %11 : vector<1x8xf32>
    %cst_11 = arith.constant 5.000000e-01 : f32
    %13 = vector.broadcast %cst_11 : f32 to vector<1x8xf32>
    %14 = arith.mulf %13, %12 : vector<1x8xf32>
    %15 = math.tanh %14 : vector<1x8xf32>
    %cst_12 = arith.constant 5.000000e-01 : f32
    %16 = vector.broadcast %cst_12 : f32 to vector<1x8xf32>
    %17 = arith.mulf %16, %15 : vector<1x8xf32>
    %cst_13 = arith.constant 5.000000e-01 : f32
    %18 = vector.broadcast %cst_13 : f32 to vector<1x8xf32>
    %19 = arith.addf %17, %18 : vector<1x8xf32>
    %c0_14 = arith.constant 0 : index
    %c0_15 = arith.constant 0 : index
    %20 = vector.load %arg6[%c0_14, %c0_15] : memref<1x8xf32, #tpu.memory_space<vmem>>, vector<1x8xf32>
    tpu.vector_store %arg6[%c0_14, %c0_15], %19 {strides = array<i32>} : memref<1x8xf32, #tpu.memory_space<vmem>>, vector<1x8xf32>,
    return
  }
  func.func @transform_0(%arg0: i32) -> (i32, i32) {
    %c0_i32 = arith.constant 0 : i32
    %c0_i32_0 = arith.constant 0 : i32
    return %arg0, %c0_i32 : i32, i32
  }
  func.func @transform_1(%arg0: i32) -> (i32, i32) {
    %c0_i32 = arith.constant 0 : i32
    %c0_i32_0 = arith.constant 0 : i32
    %c0_i32_1 = arith.constant 0 : i32
    return %c0_i32, %c0_i32_0 : i32, i32
  }
  func.func @transform_2(%arg0: i32) -> (i32, i32) {
    %c0_i32 = arith.constant 0 : i32
    %c0_i32_0 = arith.constant 0 : i32
    %c0_i32_1 = arith.constant 0 : i32
    return %c0_i32, %c0_i32_0 : i32, i32
  }
  func.func @transform_3(%arg0: i32) -> (i32, i32) {
    %c0_i32 = arith.constant 0 : i32
    %c0_i32_0 = arith.constant 0 : i32
    %c0_i32_1 = arith.constant 0 : i32
    return %c0_i32, %c0_i32_0 : i32, i32
  }
  func.func @transform_4(%arg0: i32) -> (i32, i32) {
    %c0_i32 = arith.constant 0 : i32
    %c0_i32_0 = arith.constant 0 : i32
    %c0_i32_1 = arith.constant 0 : i32
    return %c0_i32, %c0_i32_0 : i32, i32
  }
  func.func @transform_5(%arg0: i32) -> (i32, i32) {
    %c0_i32 = arith.constant 0 : i32
    %c0_i32_0 = arith.constant 0 : i32
    return %c0_i32, %arg0 : i32, i32
  }
}

</mosaic_0001>

<llo_original>
// kernel: tpu_custom_call.1
$region0: #{tpu_custom_call.1}
  #allocation0 [shape = 'u32[]', space=smem, size = 0x4, offset = 0x4, fixed_abs, tag = 'smem constant byte address 0x4 - core index']
  #allocation1 [shape = 'u32[72,128]{1,0:T(1,128)}', space=vmem, size = 0x9000, scoped, tag = 'internal scratch']
  #allocation2 [shape = 'f32[1,1]{1,0:T(1,128)S(1)}', space=vmem, size = 0x200, scoped, tag = 'scoped memory for tpu_custom_call.1']
  %s0 = inlined_call_operand.hbm [shape: f32[8,32], index: 0, kind: input, shape index: {}]
  %s1 = inlined_call_operand.hbm [shape: f32[32,64], index: 1, kind: input, shape index: {}]
  %s2 = inlined_call_operand.vmem [shape: f32[1,64], index: 2, kind: input, shape index: {}]
  %s3 = inlined_call_operand.vmem [shape: f32[1,64], index: 3, kind: input, shape index: {}]
  %s4 = inlined_call_operand.<no memory space> [shape: f32[1,1], index: 4, kind: input, shape index: {}]
  %s5 = inlined_call_operand.hbm [shape: f32[1,8], index: 5, kind: output, shape index: {}]
  %s6 = sld [smem:[#allocation0]]
  $region38: #{tpu_custom_call.1} parent=0
    _
  %s8 = ssub.s32 1, %s6
  %s9 = scalar_select 0, %s8, %s6
  %v10 = vstv %s4
  %11 = vst [vmem:[#allocation2] sm:$0x1] %v10
  $region1: #{tpu_custom_call.1} parent=0
    #allocation3 [shape = 'u8[4096]{0}', space=vmem, size = 0x1000, scoped, tag = 'input window, operand 0, single buffered']
    #allocation4 [shape = 's32[1]{0}', space=sflag, size = 0x4, scoped, tag = 'scoped memory for tpu_custom_call.1']
    #allocation5 [shape = 's32[1]{0}', space=sflag, size = 0x4, scoped, tag = 'scoped memory for tpu_custom_call.1']
    #allocation6 [shape = 'u8[16384]{0}', space=vmem, size = 0x4000, scoped, tag = 'input window, operand 1, single buffered']
    #allocation7 [shape = 's32[1]{0}', space=sflag, size = 0x4, scoped, tag = 'scoped memory for tpu_custom_call.1']
    #allocation8 [shape = 'u8[512]{0}', space=vmem, size = 0x400, scoped, tag = 'output window, operand 0, single buffered']
    %12 = vsyncpa [#allocation4], 0
    %13 = vsyncpa [#allocation7], 0
    %14 = vsyncpa [#allocation5], 0
    // Predicated region
    $region2: #{tpu_custom_call.1} parent=1 // pred_check
      _
    $region3: #{tpu_custom_call.1} parent=1 // pred_check_branch
      %16 = sbr.rel (0) target = $region5
    $region4: #{tpu_custom_call.1} parent=1 // pred_region
      %18 = vsyncadd [#allocation4], 0
      %s20 = sshll.u32 %s0, 4
      %s21 = int_to_ptr.hbm [resolvable:$true] %s20
      %s22 = sshll.u32 [#allocation3], 4
      %s23 = int_to_ptr.vmem [resolvable:$true] %s22
      %25 = dma.hbm_to_vmem [thread:$0]  %s21, 128, %s23, [#allocation4]
    $region5: #{tpu_custom_call.1} parent=1 // pred_fallthru
      _
    // Predicated region
    $region6: #{tpu_custom_call.1} parent=1 // pred_check
      _
    $region7: #{tpu_custom_call.1} parent=1 // pred_check_branch
      %27 = sbr.rel (0) target = $region9
    $region8: #{tpu_custom_call.1} parent=1 // pred_region
      %29 = vsyncadd [#allocation7], 0
      %s30 = sshll.u32 %s1, 4
      %s31 = int_to_ptr.hbm [resolvable:$true] %s30
      %s32 = sshll.u32 [#allocation6], 4
      %s33 = int_to_ptr.vmem [resolvable:$true] %s32
      %38 = dma.hbm_to_vmem [thread:$0]  %s31, 512, %s33, [#allocation7], 128, 128, 8
    $region9: #{tpu_custom_call.1} parent=1 // pred_fallthru
      _
    // Predicated region
    $region10: #{tpu_custom_call.1} parent=1 // pred_check
      _
    $region11: #{tpu_custom_call.1} parent=1 // pred_check_branch
      %40 = sbr.rel (0) target = $region13
    $region12: #{tpu_custom_call.1} parent=1 // pred_region
      _
    $region13: #{tpu_custom_call.1} parent=1 // pred_fallthru
      _
    // Predicated region
    $region14: #{tpu_custom_call.1} parent=1 // pred_check
      _
    $region15: #{tpu_custom_call.1} parent=1 // pred_check_branch
      %42 = sbr.rel (0) target = $region17
    $region16: #{tpu_custom_call.1} parent=1 // pred_region
      _
    $region17: #{tpu_custom_call.1} parent=1 // pred_fallthru
      _
    // Predicated region
    $region18: #{tpu_custom_call.1} parent=1 // pred_check
      _
    $region19: #{tpu_custom_call.1} parent=1 // pred_check_branch
      %44 = sbr.rel (0) target = $region21
    $region20: #{tpu_custom_call.1} parent=1 // pred_region
      _
    $region21: #{tpu_custom_call.1} parent=1 // pred_fallthru
      _
    // Predicated region
    $region22: #{tpu_custom_call.1} parent=1 // pred_check
      _
    $region23: #{tpu_custom_call.1} parent=1 // pred_check_branch
      %46 = sbr.rel (0) target = $region25
    $region24: #{tpu_custom_call.1} parent=1 // pred_region
      %48 = dma.done [#allocation4], 128
    $region25: #{tpu_custom_call.1} parent=1 // pred_fallthru
      _
    // Predicated region
    $region26: #{tpu_custom_call.1} parent=1 // pred_check
      _
    $region27: #{tpu_custom_call.1} parent=1 // pred_check_branch
      %50 = sbr.rel (0) target = $region29
    $region28: #{tpu_custom_call.1} parent=1 // pred_region
      %52 = dma.done [#allocation7], 512
    $region29: #{tpu_custom_call.1} parent=1 // pred_fallthru
      _
    %v53 = vld [vmem:[#allocation3] sm:$0xff]
    %v54 = vld [vmem:[#allocation6] sm:$0xff]
    %v55 = vld [vmem:[#allocation6 + $0x8] sm:$0xff]
    %v56 = vld [vmem:[#allocation6 + $0x10] sm:$0xff]
    %v57 = vld [vmem:[#allocation6 + $0x18] sm:$0xff]
    %v58 = vld [vmem:[%s2] sm:$0x1]
    %v60 = vperm.slane %v58, 0
    %vm62 = vcmask 261120
    %v64 = vsel %vm62, %v53, 0
    %66 = vmatpush.msra.mxu0 0.0
    %67 = vmatpush.msra.mxu0 0.0
    %68 = vmatpush.msra.mxu0 0.0
    %69 = vmatpush.msra.mxu0 0.0
    %70 = vmatpush.msra.mxu0 0.0
    %71 = vmatpush.msra.mxu0 0.0
    %72 = vmatpush.msra.mxu0 0.0
    %73 = vmatpush.msra.mxu0 0.0
    %74 = vmatpush.msra.mxu0 0.0
    %75 = vmatpush.msra.mxu0 0.0
    %76 = vmatpush.msra.mxu0 0.0
    %77 = vmatpush.msra.mxu0 0.0
    %78 = vmatpush.msra.mxu0 %v57
    %79 = vmatpush.msra.mxu0 %v56
    %80 = vmatpush.msra.mxu0 %v55
    %81 = vmatpush.msra.mxu0 %v54
    %82 = vmatmul.f32.gmra.mxu0 %v64
    %v83 = vpop.f32.mrf.mxu0
    %v84 = vadd.f32 %v60, %v83
    %85 = vdwg.mxu0
    %v86 = vmax.f32 %v84, 0.0
    %v87 = vld [vmem:[%s3] sm:$0x1]
    %v88 = vld [vmem:[#allocation2] sm:$0x1]
    %90 = vset.pattern.permute.xlu0 0
    %91 = vperm.xlu0 %90, %v88
    %v92 = vpop.permute.xlu0 %91
    %v94 = vperm.slane %v92, 0
    %vm95 = vcmask 523264
    %v97 = vsel %vm95, %v87, 0
    %v100 = vsel %vm95, %v86, 0
    %102 = vmatpush.xpose.msra.mxu0 0.0
    %103 = vmatpush.xpose.msra.mxu0 0.0
    %104 = vmatpush.xpose.msra.mxu0 0.0
    %105 = vmatpush.xpose.msra.mxu0 0.0
    %106 = vmatpush.xpose.msra.mxu0 0.0
    %107 = vmatpush.xpose.msra.mxu0 0.0
    %108 = vmatpush.xpose.msra.mxu0 0.0
    %109 = vmatpush.xpose.msra.mxu0 0.0
    %110 = vmatpush.xpose.msra.mxu0 0.0
    %111 = vmatpush.xpose.msra.mxu0 0.0
    %112 = vmatpush.xpose.msra.mxu0 0.0
    %113 = vmatpush.xpose.msra.mxu0 0.0
    %114 = vmatpush.xpose.msra.mxu0 0.0
    %115 = vmatpush.xpose.msra.mxu0 0.0
    %116 = vmatpush.xpose.msra.mxu0 0.0
    %117 = vmatpush.xpose.msra.mxu0 %v100
    %118 = vmatmul.f32.gmra.mxu0 %v97
    %v119 = vpop.f32.mrf.mxu0
    %v120 = vadd.f32 %v94, %v119
    %121 = vdwg.mxu0
    %v122 = vmul.f32 %v120, 0.5
    %v123 = vtanh.pop %v122
    %v124 = vmul.f32 %v123, 0.5
    %v125 = vadd.f32 %v124, 0.5
    %vm126 = vcmask 57344
    %127 = vst.msk [vmem:[#allocation8] sm:$0x1] %vm126, %v125
    // Predicated region
    $region30: #{tpu_custom_call.1} parent=1 // pred_check
      _
    $region31: #{tpu_custom_call.1} parent=1 // pred_check_branch
      %129 = sbr.rel (0) target = $region33
    $region32: #{tpu_custom_call.1} parent=1 // pred_region
      %131 = vsyncadd [#allocation5], 0
      %s133 = sshll.u32 [#allocation8], 4
      %s134 = int_to_ptr.vmem [resolvable:$true] %s133
      %s135 = sshll.u32 %s5, 4
      %s136 = int_to_ptr.hbm [resolvable:$true] %s135
      %138 = dma.vmem_to_hbm [thread:$0]  %s134, 16, %s136, [#allocation5]
    $region33: #{tpu_custom_call.1} parent=1 // pred_fallthru
      _
    // Predicated region
    $region34: #{tpu_custom_call.1} parent=1 // pred_check
      _
    $region35: #{tpu_custom_call.1} parent=1 // pred_check_branch
      %140 = sbr.rel (0) target = $region37
    $region36: #{tpu_custom_call.1} parent=1 // pred_region
      %142 = dma.done [#allocation5], 16
    $region37: #{tpu_custom_call.1} parent=1 // pred_fallthru
      _
    %143 = vsyncpa [#allocation4], 1
    %144 = vsyncpa [#allocation7], 1
    %145 = vsyncpa [#allocation5], 1

</llo_original>
